<compile_context>
chip_gen: v7x
topology: tpu7x:2x2x1
jax: 0.10.0
libtpu: 0.0.40
codegen_flags: <defaults>
</compile_context>

<pallas_src>
import jax
import jax.numpy as jnp
from jax.experimental import pallas as pl
from jax.experimental.pallas import tpu as pltpu


def _round_up(x, m):
    return -(-x // m) * m


# ---------------------------------------------------------------------------
# Pallas kernel: 1x1 conv (matmul) + bias + sigmoid + folded YOLO box decode
# ---------------------------------------------------------------------------
def _detect_kernel(lyr_ref, x_ref, w_ref, cst_ref, sel_ref, grid_ref,
                   raw_ref, dec_ref):
    """One (pixel-tile, batch) grid cell.  The tile's layer is selected via the
    scalar-prefetched `lyr_ref` inside the index_maps (not read in the body).

    x_ref:    (C_PAD, TP)   feature tile, pixels on lanes
    w_ref:    (NANO, C_PAD) 1x1-conv weight of this tile's layer
    cst_ref:  (NANO, 8)     [:,0]=bias  [:,1]=lin  [:,2]=4*anchor  (rest 0)
    sel_ref:  (NANO, 8)     [:,0]=sel_x [:,1]=sel_y                (rest 0)
    grid_ref: (8, TP)       row0=(gx-0.5)*s  row1=(gy-0.5)*s       (rest 0)
    raw_ref:  (NANO, TP)    pre-sigmoid conv output  (-> x[i])
    dec_ref:  (NANO, TP)    decoded boxes            (-> z[i])
    """
    cst = cst_ref[...]
    raw = jnp.dot(w_ref[...], x_ref[...],
                  preferred_element_type=jnp.float32) + cst[:, 0:1]   # MXU + bias
    raw_ref[...] = raw

    y = jax.nn.sigmoid(raw)                                           # EUP
    # (NANO,8)@(8,TP) outer product on the (idle) MXU instead of 3 VPU ops/elem
    grid_add = jnp.dot(sel_ref[...], grid_ref[...],
                       preferred_element_type=jnp.float32)
    # xy rows: 2s*y + (g-0.5)s ; wh rows: 4a*y^2 ; obj/cls rows: y
    dec_ref[...] = y * cst[:, 1:2] + (y * y) * cst[:, 2:3] + grid_add


# ---------------------------------------------------------------------------
# Fused Detect head forward (eval mode)
# ---------------------------------------------------------------------------
def detect_forward(x_list, weights, biases, anchor_grids, strides,
                   num_anchors, num_outputs, *, tile_cap=512):
    """Returns (cat(z, axis=1), x_list_out) exactly like the PyTorch module."""
    bs = x_list[0].shape[0]
    nano = num_anchors * num_outputs
    shapes = [x.shape[1:] for x in x_list]                 # (C, ny, nx)
    p_list = [ny * nx for _, ny, nx in shapes]
    c_max = max(c for c, _, _ in shapes)
    c_pad = max(8, _round_up(c_max, 8))

    # one lane-dense pixel-tile width; each layer's span padded to a multiple
    # of TP so no tile straddles two layers.
    tp = max(128, min(tile_cap, _round_up(max(p_list), 128)))
    tp -= tp % 128
    p_pads = [_round_up(p, tp) for p in p_list]
    p_total = sum(p_pads)
    n_tiles = p_total // tp

    j = jnp.arange(nano) % num_outputs                     # slot within anchor
    a = jnp.arange(nano) // num_outputs                    # anchor index

    x_chunks, grid_chunks = [], []
    w_rows, cst_rows, sel_rows, layer_ids = [], [], [], []
    for li, (xi, (c, ny, nx), p, p_pad, w, b, ag, s) in enumerate(
            zip(x_list, shapes, p_list, p_pads, weights, biases,
                anchor_grids, strides)):
        s = jnp.float32(s)

        # features: (bs,C,ny,nx) -> (bs,C_PAD,P_PAD); channel+pixel zero pad
        x3 = xi.reshape(bs, c, p).astype(jnp.float32)
        x_chunks.append(jnp.pad(x3, ((0, 0), (0, c_pad - c), (0, p_pad - p))))

        # per-layer 1x1-conv weight, channel-padded with zeros
        w_pad = jnp.zeros((nano, c_pad), jnp.float32).at[:, :c].set(
            w.astype(jnp.float32))
        w_rows.append(w_pad)

        # folded per-output-row decode constants
        lin = jnp.where(j < 2, 2.0 * s,
                        jnp.where(j < 4, 0.0, 1.0)).astype(jnp.float32)
        anc4 = jnp.where(j == 2, 4.0 * ag[a, 0],
                         jnp.where(j == 3, 4.0 * ag[a, 1], 0.0)).astype(jnp.float32)
        cst_rows.append(jnp.concatenate(
            [b.astype(jnp.float32)[:, None], lin[:, None], anc4[:, None],
             jnp.zeros((nano, 5), jnp.float32)], axis=1))               # (nano, 8)
        selx = (j == 0).astype(jnp.float32)
        sely = (j == 1).astype(jnp.float32)
        sel_rows.append(jnp.concatenate(
            [selx[:, None], sely[:, None],
             jnp.zeros((nano, 6), jnp.float32)], axis=1))               # (nano, 8)

        # pre-scaled pixel grid, lane-dense, padded to 8 rows for the MXU dot
        yv, xv = jnp.meshgrid(jnp.arange(ny, dtype=jnp.float32),
                              jnp.arange(nx, dtype=jnp.float32), indexing="ij")
        g = jnp.stack([(xv.reshape(p) - 0.5) * s,
                       (yv.reshape(p) - 0.5) * s], axis=0)              # (2, p)
        g = jnp.concatenate([g, jnp.zeros((6, p), jnp.float32)], axis=0)
        grid_chunks.append(jnp.pad(g, ((0, 0), (0, p_pad - p))))

        layer_ids += [li] * (p_pad // tp)

    x_all = jnp.concatenate(x_chunks, axis=2)              # (bs, C_PAD, P_TOTAL)
    grid_all = jnp.concatenate(grid_chunks, axis=1)        # (8, P_TOTAL)
    w_all = jnp.stack(w_rows)                              # (L, NANO, C_PAD)
    cst_all = jnp.stack(cst_rows)                          # (L, NANO, 8)
    sel_all = jnp.stack(sel_rows)                          # (L, NANO, 8)
    layer_of_tile = jnp.asarray(layer_ids, jnp.int32)      # (n_tiles,)

    raw, dec = pl.pallas_call(
        _detect_kernel,
        out_shape=(jax.ShapeDtypeStruct((bs, nano, p_total), jnp.float32),
                   jax.ShapeDtypeStruct((bs, nano, p_total), jnp.float32)),
        grid_spec=pltpu.PrefetchScalarGridSpec(
            num_scalar_prefetch=1,
            grid=(n_tiles, bs),                            # tiles outer, batch inner
            in_specs=[
                pl.BlockSpec((None, c_pad, tp), lambda t, b, lyr: (b, 0, t)),
                pl.BlockSpec((None, nano, c_pad), lambda t, b, lyr: (lyr[t], 0, 0)),
                pl.BlockSpec((None, nano, 8), lambda t, b, lyr: (lyr[t], 0, 0)),
                pl.BlockSpec((None, nano, 8), lambda t, b, lyr: (lyr[t], 0, 0)),
                pl.BlockSpec((8, tp), lambda t, b, lyr: (0, t)),
            ],
            out_specs=(pl.BlockSpec((None, nano, tp), lambda t, b, lyr: (b, 0, t)),
                       pl.BlockSpec((None, nano, tp), lambda t, b, lyr: (b, 0, t))),
        ),
        compiler_params=pltpu.CompilerParams(
            dimension_semantics=("parallel", "parallel")),
    )(layer_of_tile, x_all, w_all, cst_all, sel_all, grid_all)

    # output-layout glue required by the module contract
    x_out, z_list, off = [], [], 0
    for (c, ny, nx), p, p_pad in zip(shapes, p_list, p_pads):
        raw_l = raw[:, :, off:off + p]
        dec_l = dec[:, :, off:off + p]
        off += p_pad
        raw5 = raw_l.reshape(bs, num_anchors, num_outputs, ny, nx
                             ).transpose(0, 1, 3, 4, 2)
        dec5 = dec_l.reshape(bs, num_anchors, num_outputs, ny, nx
                             ).transpose(0, 1, 3, 4, 2)
        x_out.append(raw5)
        z_list.append(dec5.reshape(bs, num_anchors * ny * nx, num_outputs))
    return jnp.concatenate(z_list, axis=1), x_out


# ---------------------------------------------------------------------------
# Pure-JAX reference (mirrors the PyTorch forward exactly)
# ---------------------------------------------------------------------------
def ref_forward(x_list, weights, biases, anchor_grids, strides,
                num_anchors, num_outputs):
    x_out, z_list = [], []
    for xi, w, b, ag, s in zip(x_list, weights, biases, anchor_grids, strides):
        bs, c, ny, nx = xi.shape
        conv = jnp.einsum("bchw,oc->bohw", xi, w) + b[None, :, None, None]
        x5 = conv.reshape(bs, num_anchors, num_outputs, ny, nx).transpose(0, 1, 3, 4, 2)
        y = jax.nn.sigmoid(x5)
        yv, xv = jnp.meshgrid(jnp.arange(ny, dtype=jnp.float32),
                              jnp.arange(nx, dtype=jnp.float32), indexing="ij")
        grid = jnp.stack((xv, yv), 2).reshape(1, 1, ny, nx, 2)
        xy = (y[..., 0:2] * 2.0 - 0.5 + grid) * s
        wh = (y[..., 2:4] * 2.0) ** 2 * ag.reshape(1, num_anchors, 1, 1, 2)
        yc = jnp.concatenate([xy, wh, y[..., 4:]], axis=4)
        z_list.append(yc.reshape(bs, -1, num_outputs))
        x_out.append(x5)
    return jnp.concatenate(z_list, axis=1), x_out


# ---------------------------------------------------------------------------
if __name__ == "__main__":
    key = jax.random.PRNGKey(0)

    # Detect(num_classes=3, anchors=...) — small synthetic config
    num_classes = 3
    num_outputs = num_classes + 5            # 8
    num_anchors = 3
    channels = [8, 16, 32]                   # per detection layer
    strides = [8.0, 16.0, 32.0]
    spatial = [(32, 32), (16, 16), (8, 8)]   # ny, nx per layer (256x256 image)
    bs = 2

    anchor_grids = [
        jnp.array([[10., 13.], [16., 30.], [33., 23.]], jnp.float32),
        jnp.array([[30., 61.], [62., 45.], [59., 119.]], jnp.float32),
        jnp.array([[116., 90.], [156., 198.], [373., 326.]], jnp.float32),
    ]

    weights, biases, x_list = [], [], []
    for c, (ny, nx) in zip(channels, spatial):
        key, kw, kb, kx = jax.random.split(key, 4)
        weights.append(jax.random.normal(kw, (num_anchors * num_outputs, c),
                                         jnp.float32) * 0.1)
        biases.append(jax.random.normal(kb, (num_anchors * num_outputs,),
                                        jnp.float32) * 0.1)
        x_list.append(jax.random.normal(kx, (bs, c, ny, nx), jnp.float32))

    z_cat, x_out = detect_forward(x_list, weights, biases, anchor_grids,
                                  strides, num_anchors, num_outputs)
    jax.block_until_ready(z_cat)
    for xo in x_out:
        jax.block_until_ready(xo)

    # verify against pure-JAX reference of the PyTorch forward
    z_ref, x_ref = ref_forward(x_list, weights, biases, anchor_grids,
                               strides, num_anchors, num_outputs)
    assert z_cat.shape == z_ref.shape, (z_cat.shape, z_ref.shape)
    assert jnp.allclose(z_cat, z_ref, rtol=1e-4, atol=1e-4)
    for got, want in zip(x_out, x_ref):
        assert got.shape == want.shape, (got.shape, want.shape)
        assert jnp.allclose(got, want, rtol=1e-4, atol=1e-4)

    print("KERNEL_OK")
</pallas_src>

<mosaic_0001>
module attributes {stable_mosaic.version = 11 : i64} {
  func.func @_detect_kernel(%arg0: i32, %arg1: i32, %arg2: memref<4xi32, #tpu.memory_space<smem>>, %arg3: memref<1x32x512xf32, #tpu.memory_space<vmem>>, %arg4: memref<1x24x32xf32, #tpu.memory_space<vmem>>, %arg5: memref<1x24x8xf32, #tpu.memory_space<vmem>>, %arg6: memref<1x24x8xf32, #tpu.memory_space<vmem>>, %arg7: memref<8x512xf32, #tpu.memory_space<vmem>>, %arg8: memref<1x24x512xf32, #tpu.memory_space<vmem>>, %arg9: memref<1x24x512xf32, #tpu.memory_space<vmem>>) attributes {dimension_semantics = [#tpu.dimension_semantics<parallel>, #tpu.dimension_semantics<parallel>], iteration_bounds = array<i64: 4, 2>, scalar_prefetch = 1 : i64, scratch_operands = 0 : i64, tpu.core_type = #tpu.core_type<tc>, window_params = [{transform_indices = @transform_0, window_bounds = array<i64: 1, 32, 512>}, {transform_indices = @transform_1, window_bounds = array<i64: 1, 24, 32>}, {transform_indices = @transform_2, window_bounds = array<i64: 1, 24, 8>}, {transform_indices = @transform_3, window_bounds = array<i64: 1, 24, 8>}, {transform_indices = @transform_4, window_bounds = array<i64: 8, 512>}, {transform_indices = @transform_5, window_bounds = array<i64: 1, 24, 512>}, {transform_indices = @transform_6, window_bounds = array<i64: 1, 24, 512>}]} {
    %c0 = arith.constant 0 : index
    %c0_0 = arith.constant 0 : index
    %c0_1 = arith.constant 0 : index
    %0 = vector.load %arg5[%c0, %c0_0, %c0_1] : memref<1x24x8xf32, #tpu.memory_space<vmem>>, vector<1x24x8xf32>
    %1 = vector.shape_cast %0 : vector<1x24x8xf32> to vector<24x8xf32>
    %c0_2 = arith.constant 0 : index
    %c0_3 = arith.constant 0 : index
    %c0_4 = arith.constant 0 : index
    %2 = vector.load %arg4[%c0_2, %c0_3, %c0_4] : memref<1x24x32xf32, #tpu.memory_space<vmem>>, vector<1x24x32xf32>
    %3 = vector.shape_cast %2 : vector<1x24x32xf32> to vector<24x32xf32>
    %c0_5 = arith.constant 0 : index
    %c0_6 = arith.constant 0 : index
    %c0_7 = arith.constant 0 : index
    %4 = vector.load %arg3[%c0_5, %c0_6, %c0_7] : memref<1x32x512xf32, #tpu.memory_space<vmem>>, vector<1x32x512xf32>
    %5 = vector.shape_cast %4 : vector<1x32x512xf32> to vector<32x512xf32>
    %cst = arith.constant dense<0.000000e+00> : vector<24x512xf32>
    %6 = tpu.matmul %3, %5, %cst {dimension_numbers = #tpu.dot_dimension_numbers<[1], [0], [0], [1], [0, 0, 1, 1], [], []>} : vector<24x32xf32>, vector<32x512xf32>, vector<24x512xf32> -> vector<24x512xf32>
    %7 = vector.extract_strided_slice %1 {offsets = [0, 0], sizes = [24, 1], strides = [1, 1]} : vector<24x8xf32> to vector<24x1xf32>
    %8 = vector.broadcast %7 : vector<24x1xf32> to vector<24x512xf32>
    %9 = arith.addf %6, %8 : vector<24x512xf32>
    %c0_8 = arith.constant 0 : index
    %c0_9 = arith.constant 0 : index
    %c0_10 = arith.constant 0 : index
    %10 = vector.load %arg8[%c0_8, %c0_9, %c0_10] : memref<1x24x512xf32, #tpu.memory_space<vmem>>, vector<1x24x512xf32>
    %11 = vector.shape_cast %10 : vector<1x24x512xf32> to vector<24x512xf32>
    %12 = vector.shape_cast %9 : vector<24x512xf32> to vector<1x24x512xf32>
    tpu.vector_store %arg8[%c0_8, %c0_9, %c0_10], %12 {strides = array<i32>} : memref<1x24x512xf32, #tpu.memory_space<vmem>>, vector<1x24x512xf32>,
    %13 = arith.negf %9 : vector<24x512xf32>
    %14 = math.exp %13 : vector<24x512xf32>
    %cst_11 = arith.constant 1.000000e+00 : f32
    %15 = vector.broadcast %cst_11 : f32 to vector<24x512xf32>
    %16 = arith.addf %15, %14 : vector<24x512xf32>
    %17 = arith.divf %15, %16 : vector<24x512xf32>
    %c0_12 = arith.constant 0 : index
    %c0_13 = arith.constant 0 : index
    %c0_14 = arith.constant 0 : index
    %18 = vector.load %arg6[%c0_12, %c0_13, %c0_14] : memref<1x24x8xf32, #tpu.memory_space<vmem>>, vector<1x24x8xf32>
    %19 = vector.shape_cast %18 : vector<1x24x8xf32> to vector<24x8xf32>
    %c0_15 = arith.constant 0 : index
    %c0_16 = arith.constant 0 : index
    %20 = vector.load %arg7[%c0_15, %c0_16] : memref<8x512xf32, #tpu.memory_space<vmem>>, vector<8x512xf32>
    %cst_17 = arith.constant dense<0.000000e+00> : vector<24x512xf32>
    %21 = tpu.matmul %19, %20, %cst_17 {dimension_numbers = #tpu.dot_dimension_numbers<[1], [0], [0], [1], [0, 0, 1, 1], [], []>} : vector<24x8xf32>, vector<8x512xf32>, vector<24x512xf32> -> vector<24x512xf32>
    %22 = vector.extract_strided_slice %1 {offsets = [0, 1], sizes = [24, 1], strides = [1, 1]} : vector<24x8xf32> to vector<24x1xf32>
    %23 = vector.broadcast %22 : vector<24x1xf32> to vector<24x512xf32>
    %24 = arith.mulf %17, %23 : vector<24x512xf32>
    %25 = arith.mulf %17, %17 : vector<24x512xf32>
    %26 = vector.extract_strided_slice %1 {offsets = [0, 2], sizes = [24, 1], strides = [1, 1]} : vector<24x8xf32> to vector<24x1xf32>
    %27 = vector.broadcast %26 : vector<24x1xf32> to vector<24x512xf32>
    %28 = arith.mulf %25, %27 : vector<24x512xf32>
    %29 = arith.addf %24, %28 : vector<24x512xf32>
    %30 = arith.addf %29, %21 : vector<24x512xf32>
    %c0_18 = arith.constant 0 : index
    %c0_19 = arith.constant 0 : index
    %c0_20 = arith.constant 0 : index
    %31 = vector.load %arg9[%c0_18, %c0_19, %c0_20] : memref<1x24x512xf32, #tpu.memory_space<vmem>>, vector<1x24x512xf32>
    %32 = vector.shape_cast %31 : vector<1x24x512xf32> to vector<24x512xf32>
    %33 = vector.shape_cast %30 : vector<24x512xf32> to vector<1x24x512xf32>
    tpu.vector_store %arg9[%c0_18, %c0_19, %c0_20], %33 {strides = array<i32>} : memref<1x24x512xf32, #tpu.memory_space<vmem>>, vector<1x24x512xf32>,
    return
  }
  func.func @transform_0(%arg0: i32, %arg1: i32, %arg2: memref<4xi32, #tpu.memory_space<smem>>) -> (i32, i32, i32) {
    %c0_i32 = arith.constant 0 : i32
    %c0_i32_0 = arith.constant 0 : i32
    return %arg1, %c0_i32, %arg0 : i32, i32, i32
  }
  func.func @transform_1(%arg0: i32, %arg1: i32, %arg2: memref<4xi32, #tpu.memory_space<smem>>) -> (i32, i32, i32) {
    %0 = arith.index_cast %arg0 : i32 to index
    %1 = memref.load %arg2[%0] : memref<4xi32, #tpu.memory_space<smem>>
    %c0_i32 = arith.constant 0 : i32
    %c0_i32_0 = arith.constant 0 : i32
    %c0_i32_1 = arith.constant 0 : i32
    return %1, %c0_i32, %c0_i32_0 : i32, i32, i32
  }
  func.func @transform_2(%arg0: i32, %arg1: i32, %arg2: memref<4xi32, #tpu.memory_space<smem>>) -> (i32, i32, i32) {
    %0 = arith.index_cast %arg0 : i32 to index
    %1 = memref.load %arg2[%0] : memref<4xi32, #tpu.memory_space<smem>>
    %c0_i32 = arith.constant 0 : i32
    %c0_i32_0 = arith.constant 0 : i32
    %c0_i32_1 = arith.constant 0 : i32
    return %1, %c0_i32, %c0_i32_0 : i32, i32, i32
  }
  func.func @transform_3(%arg0: i32, %arg1: i32, %arg2: memref<4xi32, #tpu.memory_space<smem>>) -> (i32, i32, i32) {
    %0 = arith.index_cast %arg0 : i32 to index
    %1 = memref.load %arg2[%0] : memref<4xi32, #tpu.memory_space<smem>>
    %c0_i32 = arith.constant 0 : i32
    %c0_i32_0 = arith.constant 0 : i32
    %c0_i32_1 = arith.constant 0 : i32
    return %1, %c0_i32, %c0_i32_0 : i32, i32, i32
  }
  func.func @transform_4(%arg0: i32, %arg1: i32, %arg2: memref<4xi32, #tpu.memory_space<smem>>) -> (i32, i32) {
    %c0_i32 = arith.constant 0 : i32
    %c0_i32_0 = arith.constant 0 : i32
    return %c0_i32, %arg0 : i32, i32
  }
  func.func @transform_5(%arg0: i32, %arg1: i32, %arg2: memref<4xi32, #tpu.memory_space<smem>>) -> (i32, i32, i32) {
    %c0_i32 = arith.constant 0 : i32
    %c0_i32_0 = arith.constant 0 : i32
    return %arg1, %c0_i32, %arg0 : i32, i32, i32
  }
  func.func @transform_6(%arg0: i32, %arg1: i32, %arg2: memref<4xi32, #tpu.memory_space<smem>>) -> (i32, i32, i32) {
    %c0_i32 = arith.constant 0 : i32
    %c0_i32_0 = arith.constant 0 : i32
    return %arg1, %c0_i32, %arg0 : i32, i32, i32
  }
}

</mosaic_0001>

<llo_original>
// kernel: tpu_custom_call.1
$region0: #{tpu_custom_call.1}
  #allocation0 [shape = 'u32[]', space=smem, size = 0x4, offset = 0x4, fixed_abs, tag = 'smem constant byte address 0x4 - core index']
  #allocation1 [shape = 'u32[144,128]{1,0:T(1,128)}', space=vmem, size = 0x12000, scoped, tag = 'internal scratch']
  #allocation2 [shape = 's32[1]{0}', space=sflag, size = 0x4, scoped, tag = 'scoped memory for tpu_custom_call.1']
  #allocation3 [shape = 'u8[512]{0}', space=smem, size = 0x200, scoped, tag = 'prefetched SMEM operand 0']
  %s0 = inlined_call_operand.vmem [shape: s32[4], index: 0, kind: input, shape index: {}]
  %s1 = inlined_call_operand.hbm [shape: f32[2,32,2048], index: 1, kind: input, shape index: {}]
  %s2 = inlined_call_operand.vmem [shape: f32[3,24,32], index: 2, kind: input, shape index: {}]
  %s3 = inlined_call_operand.vmem [shape: f32[3,24,8], index: 3, kind: input, shape index: {}]
  %s4 = inlined_call_operand.vmem [shape: f32[3,24,8], index: 4, kind: input, shape index: {}]
  %s5 = inlined_call_operand.vmem [shape: f32[8,2048], index: 5, kind: input, shape index: {}]
  %s6 = inlined_call_operand.hbm [shape: f32[2,24,2048], index: 6, kind: output, shape index: {0}]
  %s7 = inlined_call_operand.hbm [shape: f32[2,24,2048], index: 7, kind: output, shape index: {1}]
  %8 = xla_tuple %s6, %s7
  %s9 = sld [smem:[#allocation0]]
  $region65: #{tpu_custom_call.1} parent=0
    _
  %s11 = ssub.s32 1, %s9
  %s12 = scalar_select 0, %s11, %s9
  %s13 = sshll.u32 %s0, 4
  %s14 = int_to_ptr.vmem [resolvable:$true] %s13
  %16 = dma.vmem_to_smem %s14, 16, [#allocation3], [#allocation2]
  %17 = dma.done [#allocation2], 16
  %18 = sfence
  $region1: #{tpu_custom_call.1} parent=0
    #allocation4 [shape = 'u8[131072]{0}', space=vmem, size = 0x20000, scoped, tag = 'input window, operand 1']
    #allocation5 [shape = 's32[2]{0}', space=sflag, size = 0x8, scoped, tag = 'scoped memory for tpu_custom_call.1']
    #allocation6 [shape = 's32[2]{0}', space=sflag, size = 0x8, scoped, tag = 'scoped memory for tpu_custom_call.1']
    #allocation7 [shape = 'u8[98304]{0}', space=vmem, size = 0x18000, scoped, tag = 'output window, operand 0']
    #allocation8 [shape = 'u8[98304]{0}', space=vmem, size = 0x18000, scoped, tag = 'output window, operand 1']
    #allocation9 [shape = 's32[2]{0}', space=sflag, size = 0x8, scoped, tag = 'scoped memory for tpu_custom_call.1']
    %19 = vsyncpa [#allocation5], 0
    %s20 = scalar_lea.sflag [#allocation5], 1
    %21 = vsyncpa %s20, 0
    %22 = vsyncpa [#allocation6], 0
    %s23 = scalar_lea.sflag [#allocation6], 1
    %24 = vsyncpa %s23, 0
    %25 = vsyncpa [#allocation9], 0
    %s26 = scalar_lea.sflag [#allocation9], 1
    %27 = vsyncpa %s26, 0
    loop: start=0, step=1, limit=10
    $region2: #{tpu_custom_call.1} parent=1 // loop_pre_header
      _
    $region3: #{tpu_custom_call.1} parent=1 // loop_header
      %s29 = sphi 0, %s33
      %p30 = scmp.ge.s32.totalorder %s29, 10
      %s36 = sphi 0, %s48
      %s37 = sphi 0, %s44
      %s38 = sphi 0, %s36
      %s39 = sphi 0, %s37
      %s40 = sphi 0, %s38
      %s41 = sphi 0, %s39
      %s53 = sphi 0, %s55
      %s56 = sphi 0, %s53
      %s57 = sphi 0, %s56
      %s73 = sphi 0, %s57
      %s81 = sphi 0, %s83
      %s84 = sphi 0, %s81
      %s85 = sphi 0, %s84
      %s101 = sphi 0, %s85
      %s109 = sphi 0, %s111
      %s112 = sphi 0, %s109
      %s113 = sphi 0, %s112
      %s129 = sphi 0, %s113
      %s137 = sphi 0, %s139
      %s140 = sphi 0, %s137
      %s141 = sphi 0, %s140
      %s157 = sphi 0, %s141
      %s163 = sphi 0, %s165
      %s166 = sphi 0, %s163
      %s167 = sphi 0, %s166
      %s183 = sphi 0, %s167
      %s191 = sphi 0, %s193
      %s194 = sphi 0, %s191
      %s195 = sphi 0, %s194
      %s211 = sphi 0, %s195
      %s219 = sphi 0, %s221
      %s222 = sphi 0, %s219
      %s223 = sphi 0, %s222
      %s239 = sphi 0, %s223
    $region4: #{tpu_custom_call.1} parent=1 // loop_header_branch
      %32 = sbr.rel (%p30) target = $region8
    $region5: #{tpu_custom_call.1} parent=1 // loop_body
      %s34 = ssub.s32 %s29, 1
      %s35 = ssub.s32 %s29, 2
      %s42 = sadd.s32 1, %s37
      %p43 = scmp.ge.s32.totalorder %s42, 2
      %s44 = scalar_select %p43, 0, %s42
      %s45 = sadd.s32 1, %s36
      %s46 = scalar_select %p43, %s45, %s36
      %p47 = scmp.ge.s32.totalorder %s46, 4
      %s48 = scalar_select %p47, 0, %s46
      %s49 = ssub.s32 %s37, %s44
      %s50 = ssub.s32 %s36, %s48
      %s51 = sor.u32 %s49, %s50
      %p52 = scmp.eq.s32.totalorder %s51, 0
      %s54 = sadd.s32 %s53, 1
      %s55 = scalar_select %p52, %s53, %s54
      %p58 = pneg %p52
      %p59 = scmp.eq.s32.totalorder %s29, 7
      %p60 = por %p58, %p59
      %p61 = scmp.ne.s32.totalorder %s53, %s56
      %p62 = scmp.eq.s32.totalorder %s29, 0
      %p63 = por %p61, %p62
      %p64 = scmp.ne.s32.totalorder %s53, %s56
      %p65 = scmp.eq.s32.totalorder %s34, 7
      %p66 = por %p64, %p65
      %p67 = scmp.ne.s32.totalorder %s56, %s57
      %p68 = scmp.eq.s32.totalorder %s34, 0
      %p69 = por %p67, %p68
      %p70 = scmp.ne.s32.totalorder %s56, %s57
      %p71 = scmp.eq.s32.totalorder %s35, 7
      %p72 = por %p70, %p71
      %p74 = scmp.ne.s32.totalorder %s57, %s73
      %p75 = scmp.eq.s32.totalorder %s35, 0
      %p76 = por %p74, %p75
      %s77 = sld [smem:[#allocation3 + %s36]]
      %s78 = sld [smem:[#allocation3 + %s48]]
      %s79 = ssub.s32 %s77, %s78
      %p80 = scmp.eq.s32.totalorder %s79, 0
      %s82 = sadd.s32 %s81, 1
      %s83 = scalar_select %p80, %s81, %s82
      %p86 = pneg %p80
      %p87 = scmp.eq.s32.totalorder %s29, 7
      %p88 = por %p86, %p87
      %p89 = scmp.ne.s32.totalorder %s81, %s84
      %p90 = scmp.eq.s32.totalorder %s29, 0
      %p91 = por %p89, %p90
      %p92 = scmp.ne.s32.totalorder %s81, %s84
      %p93 = scmp.eq.s32.totalorder %s34, 7
      %p94 = por %p92, %p93
      %p95 = scmp.ne.s32.totalorder %s84, %s85
      %p96 = scmp.eq.s32.totalorder %s34, 0
      %p97 = por %p95, %p96
      %p98 = scmp.ne.s32.totalorder %s84, %s85
      %p99 = scmp.eq.s32.totalorder %s35, 7
      %p100 = por %p98, %p99
      %p102 = scmp.ne.s32.totalorder %s85, %s101
      %p103 = scmp.eq.s32.totalorder %s35, 0
      %p104 = por %p102, %p103
      %s105 = sld [smem:[#allocation3 + %s36]]
      %s106 = sld [smem:[#allocation3 + %s48]]
      %s107 = ssub.s32 %s105, %s106
      %p108 = scmp.eq.s32.totalorder %s107, 0
      %s110 = sadd.s32 %s109, 1
      %s111 = scalar_select %p108, %s109, %s110
      %p114 = pneg %p108
      %p115 = scmp.eq.s32.totalorder %s29, 7
      %p116 = por %p114, %p115
      %p117 = scmp.ne.s32.totalorder %s109, %s112
      %p118 = scmp.eq.s32.totalorder %s29, 0
      %p119 = por %p117, %p118
      %p120 = scmp.ne.s32.totalorder %s109, %s112
      %p121 = scmp.eq.s32.totalorder %s34, 7
      %p122 = por %p120, %p121
      %p123 = scmp.ne.s32.totalorder %s112, %s113
      %p124 = scmp.eq.s32.totalorder %s34, 0
      %p125 = por %p123, %p124
      %p126 = scmp.ne.s32.totalorder %s112, %s113
      %p127 = scmp.eq.s32.totalorder %s35, 7
      %p128 = por %p126, %p127
      %p130 = scmp.ne.s32.totalorder %s113, %s129
      %p131 = scmp.eq.s32.totalorder %s35, 0
      %p132 = por %p130, %p131
      %s133 = sld [smem:[#allocation3 + %s36]]
      %s134 = sld [smem:[#allocation3 + %s48]]
      %s135 = ssub.s32 %s133, %s134
      %p136 = scmp.eq.s32.totalorder %s135, 0
      %s138 = sadd.s32 %s137, 1
      %s139 = scalar_select %p136, %s137, %s138
      %p142 = pneg %p136
      %p143 = scmp.eq.s32.totalorder %s29, 7
      %p144 = por %p142, %p143
      %p145 = scmp.ne.s32.totalorder %s137, %s140
      %p146 = scmp.eq.s32.totalorder %s29, 0
      %p147 = por %p145, %p146
      %p148 = scmp.ne.s32.totalorder %s137, %s140
      %p149 = scmp.eq.s32.totalorder %s34, 7
      %p150 = por %p148, %p149
      %p151 = scmp.ne.s32.totalorder %s140, %s141
      %p152 = scmp.eq.s32.totalorder %s34, 0
      %p153 = por %p151, %p152
      %p154 = scmp.ne.s32.totalorder %s140, %s141
      %p155 = scmp.eq.s32.totalorder %s35, 7
      %p156 = por %p154, %p155
      %p158 = scmp.ne.s32.totalorder %s141, %s157
      %p159 = scmp.eq.s32.totalorder %s35, 0
      %p160 = por %p158, %p159
      %s161 = ssub.s32 %s36, %s48
      %p162 = scmp.eq.s32.totalorder %s161, 0
      %s164 = sadd.s32 %s163, 1
      %s165 = scalar_select %p162, %s163, %s164
      %p168 = pneg %p162
      %p169 = scmp.eq.s32.totalorder %s29, 7
      %p170 = por %p168, %p169
      %p171 = scmp.ne.s32.totalorder %s163, %s166
      %p172 = scmp.eq.s32.totalorder %s29, 0
      %p173 = por %p171, %p172
      %p174 = scmp.ne.s32.totalorder %s163, %s166
      %p175 = scmp.eq.s32.totalorder %s34, 7
      %p176 = por %p174, %p175
      %p177 = scmp.ne.s32.totalorder %s166, %s167
      %p178 = scmp.eq.s32.totalorder %s34, 0
      %p179 = por %p177, %p178
      %p180 = scmp.ne.s32.totalorder %s166, %s167
      %p181 = scmp.eq.s32.totalorder %s35, 7
      %p182 = por %p180, %p181
      %p184 = scmp.ne.s32.totalorder %s167, %s183
      %p185 = scmp.eq.s32.totalorder %s35, 0
      %p186 = por %p184, %p185
      %s187 = ssub.s32 %s37, %s44
      %s188 = ssub.s32 %s36, %s48
      %s189 = sor.u32 %s187, %s188
      %p190 = scmp.eq.s32.totalorder %s189, 0
      %s192 = sadd.s32 %s191, 1
      %s193 = scalar_select %p190, %s191, %s192
      %p196 = pneg %p190
      %p197 = scmp.eq.s32.totalorder %s29, 7
      %p198 = por %p196, %p197
      %p199 = scmp.ne.s32.totalorder %s191, %s194
      %p200 = scmp.eq.s32.totalorder %s29, 0
      %p201 = por %p199, %p200
      %p202 = scmp.ne.s32.totalorder %s191, %s194
      %p203 = scmp.eq.s32.totalorder %s34, 7
      %p204 = por %p202, %p203
      %p205 = scmp.ne.s32.totalorder %s194, %s195
      %p206 = scmp.eq.s32.totalorder %s34, 0
      %p207 = por %p205, %p206
      %p208 = scmp.ne.s32.totalorder %s194, %s195
      %p209 = scmp.eq.s32.totalorder %s35, 7
      %p210 = por %p208, %p209
      %p212 = scmp.ne.s32.totalorder %s195, %s211
      %p213 = scmp.eq.s32.totalorder %s35, 0
      %p214 = por %p212, %p213
      %s215 = ssub.s32 %s37, %s44
      %s216 = ssub.s32 %s36, %s48
      %s217 = sor.u32 %s215, %s216
      %p218 = scmp.eq.s32.totalorder %s217, 0
      %s220 = sadd.s32 %s219, 1
      %s221 = scalar_select %p218, %s219, %s220
      %p224 = pneg %p218
      %p225 = scmp.eq.s32.totalorder %s29, 7
      %p226 = por %p224, %p225
      %p227 = scmp.ne.s32.totalorder %s219, %s222
      %p228 = scmp.eq.s32.totalorder %s29, 0
      %p229 = por %p227, %p228
      %p230 = scmp.ne.s32.totalorder %s219, %s222
      %p231 = scmp.eq.s32.totalorder %s34, 7
      %p232 = por %p230, %p231
      %p233 = scmp.ne.s32.totalorder %s222, %s223
      %p234 = scmp.eq.s32.totalorder %s34, 0
      %p235 = por %p233, %p234
      %p236 = scmp.ne.s32.totalorder %s222, %s223
      %p237 = scmp.eq.s32.totalorder %s35, 7
      %p238 = por %p236, %p237
      %p240 = scmp.ne.s32.totalorder %s223, %s239
      %p241 = scmp.eq.s32.totalorder %s35, 0
      %p242 = por %p240, %p241
      %p243 = scmp.le.s32.totalorder 1, %s29
      %p244 = scmp.lt.s32.totalorder %s29, 9
      %p245 = pnand %p243, %p244
      %p246 = pneg %p245
      // Predicated region
      $region9: #{tpu_custom_call.1} parent=5 // pred_check
        _
      $region10: #{tpu_custom_call.1} parent=5 // pred_check_branch
        %248 = sbr.rel (%p245) target = $region12
      $region11: #{tpu_custom_call.1} parent=5 // pred_region
        %s249 = ssub.s32 %s29, 1
      $region12: #{tpu_custom_call.1} parent=5 // pred_fallthru
        _
      %p250 = scmp.lt.s32.totalorder %s29, 8
      // Predicated region
      $region13: #{tpu_custom_call.1} parent=5 // pred_check
        %p251 = pneg %p250
      $region14: #{tpu_custom_call.1} parent=5 // pred_check_branch
        %253 = sbr.rel (%p251) target = $region16
      $region15: #{tpu_custom_call.1} parent=5 // pred_region
        // Predicated region
        $region17: #{tpu_custom_call.1} parent=15 // pred_check
          %p254 = pneg %p63
        $region18: #{tpu_custom_call.1} parent=15 // pred_check_branch
          %256 = sbr.rel (%p254) target = $region20
        $region19: #{tpu_custom_call.1} parent=15 // pred_region
          %s257 = sand.u32 %s53, 1
          %s258 = scalar_lea.sflag [#allocation5], %s257
          %s259 = sand.u32 %s53, 1
          %s260 = smul.addr %s259, 128
          %s261 = scalar_lea.vmem [#allocation4], %s260
          %s262 = smul.u32 4, %s36
          %s264 = ssub.s32 2048, 2048
          %265 = vsyncadd %s258, %s264
          %s266 = smul.addr %s37, 64
          %s267 = sadd.s32 %s262, %s266
          %s268 = smul.addr %s267, 128
          %s269 = scalar_lea.hbm %s1, %s268
          %s270 = sshll.u32 %s261, 4
          %s271 = int_to_ptr.vmem [resolvable:$true] %s270
          %276 = dma.hbm_to_vmem [thread:$0]  %s269, 2048, %s271, %s258, 2048, 512, 32
        $region20: #{tpu_custom_call.1} parent=15 // pred_fallthru
          _
        // Predicated region
        $region21: #{tpu_custom_call.1} parent=15 // pred_check
          %p277 = pneg %p91
        $region22: #{tpu_custom_call.1} parent=15 // pred_check_branch
          %279 = sbr.rel (%p277) target = $region24
        $region23: #{tpu_custom_call.1} parent=15 // pred_region
          %s280 = sld [smem:[#allocation3 + %s36]]
          %p281 = scmp.lt.s32.totalorder %s280, 2
          %s282 = scalar_select %p281, %s280, 2
          %s283 = smul.addr %s282, 3
          %s284 = smul.addr %s283, 8
          %s285 = scalar_lea.vmem %s2, %s284
          %s286 = sld [smem:[#allocation3 + %s36]]
        $region24: #{tpu_custom_call.1} parent=15 // pred_fallthru
          _
        // Predicated region
        $region25: #{tpu_custom_call.1} parent=15 // pred_check
          %p287 = pneg %p119
        $region26: #{tpu_custom_call.1} parent=15 // pred_check_branch
          %289 = sbr.rel (%p287) target = $region28
        $region27: #{tpu_custom_call.1} parent=15 // pred_region
          %s290 = sld [smem:[#allocation3 + %s36]]
          %p291 = scmp.lt.s32.totalorder %s290, 2
          %s292 = scalar_select %p291, %s290, 2
          %s293 = smul.addr %s292, 3
          %s294 = smul.addr %s293, 8
          %s295 = scalar_lea.vmem %s3, %s294
          %s296 = sld [smem:[#allocation3 + %s36]]
        $region28: #{tpu_custom_call.1} parent=15 // pred_fallthru
          _
        // Predicated region
        $region29: #{tpu_custom_call.1} parent=15 // pred_check
          %p297 = pneg %p147
        $region30: #{tpu_custom_call.1} parent=15 // pred_check_branch
          %299 = sbr.rel (%p297) target = $region32
        $region31: #{tpu_custom_call.1} parent=15 // pred_region
          %s300 = sld [smem:[#allocation3 + %s36]]
          %p301 = scmp.lt.s32.totalorder %s300, 2
          %s302 = scalar_select %p301, %s300, 2
          %s303 = smul.addr %s302, 3
          %s304 = smul.addr %s303, 8
          %s305 = scalar_lea.vmem %s4, %s304
          %s306 = sld [smem:[#allocation3 + %s36]]
        $region32: #{tpu_custom_call.1} parent=15 // pred_fallthru
          _
        // Predicated region
        $region33: #{tpu_custom_call.1} parent=15 // pred_check
          %p307 = pneg %p173
        $region34: #{tpu_custom_call.1} parent=15 // pred_check_branch
          %309 = sbr.rel (%p307) target = $region36
        $region35: #{tpu_custom_call.1} parent=15 // pred_region
          %s310 = smul.u32 4, %s36
          %p311 = scmp.lt.s32.totalorder %s310, 15
          %s312 = scalar_select %p311, %s310, 15
          %s313 = smul.addr %s312, 8
          %s314 = scalar_lea.vmem %s5, %s313
          %s315 = smul.u32 4, %s36
        $region36: #{tpu_custom_call.1} parent=15 // pred_fallthru
          _
      $region16: #{tpu_custom_call.1} parent=5 // pred_fallthru
        _
      %p316 = scmp.le.s32.totalorder 1, %s29
      %p317 = scmp.lt.s32.totalorder %s29, 9
      %p318 = pnand %p316, %p317
      %p319 = pneg %p318
      // Predicated region
      $region37: #{tpu_custom_call.1} parent=5 // pred_check
        _
      $region38: #{tpu_custom_call.1} parent=5 // pred_check_branch
        %321 = sbr.rel (%p318) target = $region40
      $region39: #{tpu_custom_call.1} parent=5 // pred_region
        %s322 = ssub.s32 %s29, 1
        %s323 = sand.u32 %s56, 1
        %s324 = scalar_lea.sflag [#allocation5], %s323
        %s325 = sand.u32 %s56, 1
        %s326 = smul.addr %s325, 128
        %s327 = scalar_lea.vmem [#allocation4], %s326
        // Predicated region
        $region41: #{tpu_custom_call.1} parent=39 // pred_check
          %p328 = pneg %p69
        $region42: #{tpu_custom_call.1} parent=39 // pred_check_branch
          %330 = sbr.rel (%p328) target = $region44
        $region43: #{tpu_custom_call.1} parent=39 // pred_region
          %331 = dma.done %s324, 2048
        $region44: #{tpu_custom_call.1} parent=39 // pred_fallthru
          _
        %s332 = sand.u32 %s56, 1
        %s333 = scalar_lea.sflag [#allocation5], %s332
        %s334 = sand.u32 %s56, 1
        %s335 = smul.addr %s334, 128
        %s336 = scalar_lea.vmem [#allocation4], %s335
        %p337 = pneg %p69
        %p338 = pneg %p66
        %s339 = sld [smem:[#allocation3 + %s38]]
        %p340 = scmp.lt.s32.totalorder %s339, 2
        %s341 = scalar_select %p340, %s339, 2
        %s342 = smul.addr %s341, 3
        %s343 = smul.addr %s342, 8
        %s344 = scalar_lea.vmem %s2, %s343
        %p345 = pneg %p97
        %p346 = pneg %p94
        %s347 = sld [smem:[#allocation3 + %s38]]
        %p348 = scmp.lt.s32.totalorder %s347, 2
        %s349 = scalar_select %p348, %s347, 2
        %s350 = smul.addr %s349, 3
        %s351 = smul.addr %s350, 8
        %s352 = scalar_lea.vmem %s3, %s351
        %p353 = pneg %p125
        %p354 = pneg %p122
        %s355 = sld [smem:[#allocation3 + %s38]]
        %p356 = scmp.lt.s32.totalorder %s355, 2
        %s357 = scalar_select %p356, %s355, 2
        %s358 = smul.addr %s357, 3
        %s359 = smul.addr %s358, 8
        %s360 = scalar_lea.vmem %s4, %s359
        %p361 = pneg %p153
        %p362 = pneg %p150
        %s363 = smul.u32 4, %s38
        %p364 = scmp.lt.s32.totalorder %s363, 15
        %s365 = scalar_select %p364, %s363, 15
        %s366 = smul.addr %s365, 8
        %s367 = scalar_lea.vmem %s5, %s366
        %p368 = pneg %p179
        %p369 = pneg %p176
        %p370 = pneg %p207
        %p371 = pneg %p204
        %s372 = sand.u32 %s194, 1
        %s373 = scalar_lea.sflag [#allocation6], %s372
        %s374 = sand.u32 %s194, 1
        %s375 = smul.addr %s374, 96
        %s376 = scalar_lea.vmem [#allocation7], %s375
        %p377 = pneg %p235
        %p378 = pneg %p232
        %s379 = sand.u32 %s222, 1
        %s380 = scalar_lea.sflag [#allocation9], %s379
        %s381 = sand.u32 %s222, 1
        %s382 = smul.addr %s381, 96
        %s383 = scalar_lea.vmem [#allocation8], %s382
        %s384 = smul.u32 4, %s38
        %s385 = sld [smem:[#allocation3 + %s38]]
        %p386 = scmp.lt.s32.totalorder %s385, 2
        %s387 = scalar_select %p386, %s385, 2
        %s388 = smul.addr %s387, 3
        %s389 = smul.addr %s388, 8
        %s390 = scalar_lea.vmem %s2, %s389
        %s391 = sld [smem:[#allocation3 + %s38]]
        %s392 = sld [smem:[#allocation3 + %s38]]
        %p393 = scmp.lt.s32.totalorder %s392, 2
        %s394 = scalar_select %p393, %s392, 2
        %s395 = smul.addr %s394, 3
        %s396 = smul.addr %s395, 8
        %s397 = scalar_lea.vmem %s3, %s396
        %s398 = sld [smem:[#allocation3 + %s38]]
        %s399 = sld [smem:[#allocation3 + %s38]]
        %p400 = scmp.lt.s32.totalorder %s399, 2
        %s401 = scalar_select %p400, %s399, 2
        %s402 = smul.addr %s401, 3
        %s403 = smul.addr %s402, 8
        %s404 = scalar_lea.vmem %s4, %s403
        %s405 = sld [smem:[#allocation3 + %s38]]
        %s406 = smul.u32 4, %s38
        %p407 = scmp.lt.s32.totalorder %s406, 15
        %s408 = scalar_select %p407, %s406, 15
        %s409 = smul.addr %s408, 8
        %s410 = scalar_lea.vmem %s5, %s409
        %s411 = smul.u32 4, %s38
        %s412 = smul.u32 4, %s38
        %s413 = smul.u32 4, %s38
        %v414 = vld [vmem:[%s397] sm:$0xff]
        %v415 = vld [vmem:[%s397 + $0x8] sm:$0xff]
        %v416 = vld [vmem:[%s397 + $0x10] sm:$0xff]
        %v417 = vld [vmem:[%s390] sm:$0xff]
        %v418 = vld [vmem:[%s390 + $0x8] sm:$0xff]
        %v419 = vld [vmem:[%s390 + $0x10] sm:$0xff]
        %v420 = vld [vmem:[%s327] sm:$0xff]
        %v421 = vld [vmem:[%s327 + $0x8] sm:$0xff]
        %v422 = vld [vmem:[%s327 + $0x10] sm:$0xff]
        %v423 = vld [vmem:[%s327 + $0x18] sm:$0xff]
        %v424 = vld [vmem:[%s327 + $0x20] sm:$0xff]
        %v425 = vld [vmem:[%s327 + $0x28] sm:$0xff]
        %v426 = vld [vmem:[%s327 + $0x30] sm:$0xff]
        %v427 = vld [vmem:[%s327 + $0x38] sm:$0xff]
        %v428 = vld [vmem:[%s327 + $0x40] sm:$0xff]
        %v429 = vld [vmem:[%s327 + $0x48] sm:$0xff]
        %v430 = vld [vmem:[%s327 + $0x50] sm:$0xff]
        %v431 = vld [vmem:[%s327 + $0x58] sm:$0xff]
        %v432 = vld [vmem:[%s327 + $0x60] sm:$0xff]
        %v433 = vld [vmem:[%s327 + $0x68] sm:$0xff]
        %v434 = vld [vmem:[%s327 + $0x70] sm:$0xff]
        %v435 = vld [vmem:[%s327 + $0x78] sm:$0xff]
        %437 = vset.pattern.permute.xlu0 0
        %438 = vperm.xlu0 %437, %v414
        %v439 = vpop.permute.xlu0 %438
        %442 = vset.pattern.permute.xlu0 0
        %443 = vperm.xlu0 %442, %v415
        %v444 = vpop.permute.xlu0 %443
        %447 = vset.pattern.permute.xlu0 0
        %448 = vperm.xlu0 %447, %v416
        %v449 = vpop.permute.xlu0 %448
        %vm451 = vcmask 261120
        %v453 = vsel %vm451, %v417, 0
        %v456 = vsel %vm451, %v418, 0
        %v459 = vsel %vm451, %v419, 0
        %461 = vmatprep.subr.mxu0 %v421
        %462 = vmatpush1.msra.mxu0 %v420
        %463 = vmatprep.subr.mxu0 %v425
        %464 = vmatpush1.msra.mxu0 %v424
        %465 = vmatprep.subr.mxu0 %v429
        %466 = vmatpush1.msra.mxu0 %v428
        %467 = vmatprep.subr.mxu0 %v433
        %468 = vmatpush1.msra.mxu0 %v432
        %469 = vmatprep.subr.mxu0 0.0
        %470 = vmatpush1.msra.mxu0 0.0
        %471 = vmatprep.subr.mxu0 0.0
        %472 = vmatpush1.msra.mxu0 0.0
        %473 = vmatprep.subr.mxu0 0.0
        %474 = vmatpush1.msra.mxu0 0.0
        %475 = vmatprep.subr.mxu0 0.0
        %476 = vmatpush1.msra.mxu0 0.0
        %477 = vmatprep.subr.mxu0 0.0
        %478 = vmatpush1.msra.mxu0 0.0
        %479 = vmatprep.subr.mxu0 0.0
        %480 = vmatpush1.msra.mxu0 0.0
        %481 = vmatprep.subr.mxu0 0.0
        %482 = vmatpush1.msra.mxu0 0.0
        %483 = vmatprep.subr.mxu0 0.0
        %484 = vmatpush1.msra.mxu0 0.0
        %485 = vmatprep.subr.mxu0 0.0
        %486 = vmatpush1.msra.mxu0 0.0
        %487 = vmatprep.subr.mxu0 0.0
        %488 = vmatpush1.msra.mxu0 0.0
        %489 = vmatprep.subr.mxu0 0.0
        %490 = vmatpush1.msra.mxu0 0.0
        %491 = vmatprep.subr.mxu0 0.0
        %492 = vmatpush1.msra.mxu0 0.0
        %493 = vmatprep.subr.mxu0 0.0
        %494 = vmatpush1.msra.mxu0 0.0
        %495 = vmatprep.subr.mxu0 0.0
        %496 = vmatpush1.msra.mxu0 0.0
        %497 = vmatprep.subr.mxu0 0.0
        %498 = vmatpush1.msra.mxu0 0.0
        %499 = vmatprep.subr.mxu0 0.0
        %500 = vmatpush1.msra.mxu0 0.0
        %501 = vmatprep.subr.mxu0 0.0
        %502 = vmatpush1.msra.mxu0 0.0
        %503 = vmatprep.subr.mxu0 0.0
        %504 = vmatpush1.msra.mxu0 0.0
        %505 = vmatprep.subr.mxu0 0.0
        %506 = vmatpush1.msra.mxu0 0.0
        %507 = vmatprep.subr.mxu0 0.0
        %508 = vmatpush1.msra.mxu0 0.0
        %509 = vmatprep.subr.mxu0 0.0
        %510 = vmatpush1.msra.mxu0 0.0
        %511 = vmatprep.subr.mxu0 0.0
        %512 = vmatpush1.msra.mxu0 0.0
        %513 = vmatprep.subr.mxu0 0.0
        %514 = vmatpush1.msra.mxu0 0.0
        %515 = vmatprep.subr.mxu0 0.0
        %516 = vmatpush1.msra.mxu0 0.0
        %517 = vmatprep.subr.mxu0 0.0
        %518 = vmatpush1.msra.mxu0 0.0
        %519 = vmatprep.subr.mxu0 0.0
        %520 = vmatpush1.msra.mxu0 0.0
        %521 = vmatprep.subr.mxu0 0.0
        %522 = vmatpush1.msra.mxu0 0.0
        %523 = vmatprep.subr.mxu0 0.0
        %524 = vmatpush1.msra.mxu0 0.0
        %525 = vmatprep.mubr.f32.mxu0 0.0
        %526 = vmatmul.mubr.f32.gmra.mrb[0].mxu0 %v453
        %v527 = vpop.f32.mrb[0].mxu0
        %v528 = vadd.f32 %v439, %v527
        %v529 = vpop.f32.mrb[0].mxu0
        %v530 = vadd.f32 %v439, %v529
        %531 = vmatprep.mubr.f32.mxu0 0.0
        %532 = vmatmul.mubr.f32.gmra.mrb[0].mxu0 %v456
        %v533 = vpop.f32.mrb[0].mxu0
        %v534 = vadd.f32 %v444, %v533
        %v535 = vpop.f32.mrb[0].mxu0
        %v536 = vadd.f32 %v444, %v535
        %537 = vmatprep.mubr.f32.mxu0 0.0
        %538 = vmatmul.mubr.f32.gmra.mrb[0].mxu0 %v459
        %v539 = vpop.f32.mrb[0].mxu0
        %v540 = vadd.f32 %v449, %v539
        %v541 = vpop.f32.mrb[0].mxu0
        %v542 = vadd.f32 %v449, %v541
        %543 = vdwg.mxu0
        %544 = vmatprep.subr.mxu0 %v423
        %545 = vmatpush1.msra.mxu0 %v422
        %546 = vmatprep.subr.mxu0 %v427
        %547 = vmatpush1.msra.mxu0 %v426
        %548 = vmatprep.subr.mxu0 %v431
        %549 = vmatpush1.msra.mxu0 %v430
        %550 = vmatprep.subr.mxu0 %v435
        %551 = vmatpush1.msra.mxu0 %v434
        %552 = vmatprep.subr.mxu0 0.0
        %553 = vmatpush1.msra.mxu0 0.0
        %554 = vmatprep.subr.mxu0 0.0
        %555 = vmatpush1.msra.mxu0 0.0
        %556 = vmatprep.subr.mxu0 0.0
        %557 = vmatpush1.msra.mxu0 0.0
        %558 = vmatprep.subr.mxu0 0.0
        %559 = vmatpush1.msra.mxu0 0.0
        %560 = vmatprep.subr.mxu0 0.0
        %561 = vmatpush1.msra.mxu0 0.0
        %562 = vmatprep.subr.mxu0 0.0
        %563 = vmatpush1.msra.mxu0 0.0
        %564 = vmatprep.subr.mxu0 0.0
        %565 = vmatpush1.msra.mxu0 0.0
        %566 = vmatprep.subr.mxu0 0.0
        %567 = vmatpush1.msra.mxu0 0.0
        %568 = vmatprep.subr.mxu0 0.0
        %569 = vmatpush1.msra.mxu0 0.0
        %570 = vmatprep.subr.mxu0 0.0
        %571 = vmatpush1.msra.mxu0 0.0
        %572 = vmatprep.subr.mxu0 0.0
        %573 = vmatpush1.msra.mxu0 0.0
        %574 = vmatprep.subr.mxu0 0.0
        %575 = vmatpush1.msra.mxu0 0.0
        %576 = vmatprep.subr.mxu0 0.0
        %577 = vmatpush1.msra.mxu0 0.0
        %578 = vmatprep.subr.mxu0 0.0
        %579 = vmatpush1.msra.mxu0 0.0
        %580 = vmatprep.subr.mxu0 0.0
        %581 = vmatpush1.msra.mxu0 0.0
        %582 = vmatprep.subr.mxu0 0.0
        %583 = vmatpush1.msra.mxu0 0.0
        %584 = vmatprep.subr.mxu0 0.0
        %585 = vmatpush1.msra.mxu0 0.0
        %586 = vmatprep.subr.mxu0 0.0
        %587 = vmatpush1.msra.mxu0 0.0
        %588 = vmatprep.subr.mxu0 0.0
        %589 = vmatpush1.msra.mxu0 0.0
        %590 = vmatprep.subr.mxu0 0.0
        %591 = vmatpush1.msra.mxu0 0.0
        %592 = vmatprep.subr.mxu0 0.0
        %593 = vmatpush1.msra.mxu0 0.0
        %594 = vmatprep.subr.mxu0 0.0
        %595 = vmatpush1.msra.mxu0 0.0
        %596 = vmatprep.subr.mxu0 0.0
        %597 = vmatpush1.msra.mxu0 0.0
        %598 = vmatprep.subr.mxu0 0.0
        %599 = vmatpush1.msra.mxu0 0.0
        %600 = vmatprep.subr.mxu0 0.0
        %601 = vmatpush1.msra.mxu0 0.0
        %602 = vmatprep.subr.mxu0 0.0
        %603 = vmatpush1.msra.mxu0 0.0
        %604 = vmatprep.subr.mxu0 0.0
        %605 = vmatpush1.msra.mxu0 0.0
        %606 = vmatprep.subr.mxu0 0.0
        %607 = vmatpush1.msra.mxu0 0.0
        %608 = vmatprep.mubr.f32.mxu0 0.0
        %609 = vmatmul.mubr.f32.gmra.mrb[0].mxu0 %v453
        %v610 = vpop.f32.mrb[0].mxu0
        %v611 = vadd.f32 %v439, %v610
        %v612 = vpop.f32.mrb[0].mxu0
        %v613 = vadd.f32 %v439, %v612
        %614 = vmatprep.mubr.f32.mxu0 0.0
        %615 = vmatmul.mubr.f32.gmra.mrb[0].mxu0 %v456
        %v616 = vpop.f32.mrb[0].mxu0
        %v617 = vadd.f32 %v444, %v616
        %v618 = vpop.f32.mrb[0].mxu0
        %v619 = vadd.f32 %v444, %v618
        %620 = vmatprep.mubr.f32.mxu0 0.0
        %621 = vmatmul.mubr.f32.gmra.mrb[0].mxu0 %v459
        %v622 = vpop.f32.mrb[0].mxu0
        %v623 = vadd.f32 %v449, %v622
        %v624 = vpop.f32.mrb[0].mxu0
        %v625 = vadd.f32 %v449, %v624
        %626 = vdwg.mxu0
        %627 = vst [vmem:[%s376] sm:$0xff] %v528
        %628 = vst [vmem:[%s376 + $0x8] sm:$0xff] %v530
        %629 = vst [vmem:[%s376 + $0x10] sm:$0xff] %v611
        %630 = vst [vmem:[%s376 + $0x18] sm:$0xff] %v613
        %631 = vst [vmem:[%s376 + $0x20] sm:$0xff] %v534
        %632 = vst [vmem:[%s376 + $0x28] sm:$0xff] %v536
        %633 = vst [vmem:[%s376 + $0x30] sm:$0xff] %v617
        %634 = vst [vmem:[%s376 + $0x38] sm:$0xff] %v619
        %635 = vst [vmem:[%s376 + $0x40] sm:$0xff] %v540
        %636 = vst [vmem:[%s376 + $0x48] sm:$0xff] %v542
        %637 = vst [vmem:[%s376 + $0x50] sm:$0xff] %v623
        %638 = vst [vmem:[%s376 + $0x58] sm:$0xff] %v625
        %v639 = vxor.u32 %v528, 2147483648
        %v640 = vxor.u32 %v530, 2147483648
        %v641 = vxor.u32 %v611, 2147483648
        %v642 = vxor.u32 %v613, 2147483648
        %v643 = vxor.u32 %v534, 2147483648
        %v644 = vxor.u32 %v536, 2147483648
        %v645 = vxor.u32 %v617, 2147483648
        %v646 = vxor.u32 %v619, 2147483648
        %v647 = vxor.u32 %v540, 2147483648
        %v648 = vxor.u32 %v542, 2147483648
        %v649 = vxor.u32 %v623, 2147483648
        %v650 = vxor.u32 %v625, 2147483648
        %v651 = vmul.f32 %v639, 1.442695
        %v652 = vpow.pop %v651
        %v653 = vmul.f32 %v640, 1.442695
        %v654 = vpow.pop %v653
        %v655 = vmul.f32 %v641, 1.442695
        %v656 = vpow.pop %v655
        %v657 = vmul.f32 %v642, 1.442695
        %v658 = vpow.pop %v657
        %v659 = vmul.f32 %v643, 1.442695
        %v660 = vpow.pop %v659
        %v661 = vmul.f32 %v644, 1.442695
        %v662 = vpow.pop %v661
        %v663 = vmul.f32 %v645, 1.442695
        %v664 = vpow.pop %v663
        %v665 = vmul.f32 %v646, 1.442695
        %v666 = vpow.pop %v665
        %v667 = vmul.f32 %v647, 1.442695
        %v668 = vpow.pop %v667
        %v669 = vmul.f32 %v648, 1.442695
        %v670 = vpow.pop %v669
        %v671 = vmul.f32 %v649, 1.442695
        %v672 = vpow.pop %v671
        %v673 = vmul.f32 %v650, 1.442695
        %v674 = vpow.pop %v673
        %v675 = vadd.f32 %v652, 1.0
        %v676 = vadd.f32 %v654, 1.0
        %v677 = vadd.f32 %v656, 1.0
        %v678 = vadd.f32 %v658, 1.0
        %v679 = vadd.f32 %v660, 1.0
        %v680 = vadd.f32 %v662, 1.0
        %v681 = vadd.f32 %v664, 1.0
        %v682 = vadd.f32 %v666, 1.0
        %v683 = vadd.f32 %v668, 1.0
        %v684 = vadd.f32 %v670, 1.0
        %v685 = vadd.f32 %v672, 1.0
        %v686 = vadd.f32 %v674, 1.0
        %v687 = vrcp.pop %v675
        %v688 = vmul.f32 1.0, %v687
        %v689 = vrcp.pop %v676
        %v690 = vmul.f32 1.0, %v689
        %v691 = vrcp.pop %v677
        %v692 = vmul.f32 1.0, %v691
        %v693 = vrcp.pop %v678
        %v694 = vmul.f32 1.0, %v693
        %v695 = vrcp.pop %v679
        %v696 = vmul.f32 1.0, %v695
        %v697 = vrcp.pop %v680
        %v698 = vmul.f32 1.0, %v697
        %v699 = vrcp.pop %v681
        %v700 = vmul.f32 1.0, %v699
        %v701 = vrcp.pop %v682
        %v702 = vmul.f32 1.0, %v701
        %v703 = vrcp.pop %v683
        %v704 = vmul.f32 1.0, %v703
        %v705 = vrcp.pop %v684
        %v706 = vmul.f32 1.0, %v705
        %v707 = vrcp.pop %v685
        %v708 = vmul.f32 1.0, %v707
        %v709 = vrcp.pop %v686
        %v710 = vmul.f32 1.0, %v709
        %v711 = vld [vmem:[%s404] sm:$0xff]
        %v712 = vld [vmem:[%s404 + $0x8] sm:$0xff]
        %v713 = vld [vmem:[%s404 + $0x10] sm:$0xff]
        %v714 = vld [vmem:[%s410] sm:$0xff]
        %v715 = vld [vmem:[%s410 + $0x8] sm:$0xff]
        %v716 = vld [vmem:[%s410 + $0x10] sm:$0xff]
        %v717 = vld [vmem:[%s410 + $0x18] sm:$0xff]
        %vm718 = vcmask 64512
        %v720 = vsel %vm718, %v711, 0
        %v723 = vsel %vm718, %v712, 0
        %v726 = vsel %vm718, %v713, 0
        %728 = vmatprep.subr.mxu0 %v715
        %729 = vmatpush1.msra.mxu0 %v714
        %730 = vmatprep.subr.mxu0 0.0
        %731 = vmatpush1.msra.mxu0 0.0
        %732 = vmatprep.subr.mxu0 0.0
        %733 = vmatpush1.msra.mxu0 0.0
        %734 = vmatprep.subr.mxu0 0.0
        %735 = vmatpush1.msra.mxu0 0.0
        %736 = vmatprep.subr.mxu0 0.0
        %737 = vmatpush1.msra.mxu0 0.0
        %738 = vmatprep.subr.mxu0 0.0
        %739 = vmatpush1.msra.mxu0 0.0
        %740 = vmatprep.subr.mxu0 0.0
        %741 = vmatpush1.msra.mxu0 0.0
        %742 = vmatprep.subr.mxu0 0.0
        %743 = vmatpush1.msra.mxu0 0.0
        %744 = vmatprep.subr.mxu0 0.0
        %745 = vmatpush1.msra.mxu0 0.0
        %746 = vmatprep.subr.mxu0 0.0
        %747 = vmatpush1.msra.mxu0 0.0
        %748 = vmatprep.subr.mxu0 0.0
        %749 = vmatpush1.msra.mxu0 0.0
        %750 = vmatprep.subr.mxu0 0.0
        %751 = vmatpush1.msra.mxu0 0.0
        %752 = vmatprep.subr.mxu0 0.0
        %753 = vmatpush1.msra.mxu0 0.0
        %754 = vmatprep.subr.mxu0 0.0
        %755 = vmatpush1.msra.mxu0 0.0
        %756 = vmatprep.subr.mxu0 0.0
        %757 = vmatpush1.msra.mxu0 0.0
        %758 = vmatprep.subr.mxu0 0.0
        %759 = vmatpush1.msra.mxu0 0.0
        %760 = vmatprep.subr.mxu0 0.0
        %761 = vmatpush1.msra.mxu0 0.0
        %762 = vmatprep.subr.mxu0 0.0
        %763 = vmatpush1.msra.mxu0 0.0
        %764 = vmatprep.subr.mxu0 0.0
        %765 = vmatpush1.msra.mxu0 0.0
        %766 = vmatprep.subr.mxu0 0.0
        %767 = vmatpush1.msra.mxu0 0.0
        %768 = vmatprep.subr.mxu0 0.0
        %769 = vmatpush1.msra.mxu0 0.0
        %770 = vmatprep.subr.mxu0 0.0
        %771 = vmatpush1.msra.mxu0 0.0
        %772 = vmatprep.subr.mxu0 0.0
        %773 = vmatpush1.msra.mxu0 0.0
        %774 = vmatprep.subr.mxu0 0.0
        %775 = vmatpush1.msra.mxu0 0.0
        %776 = vmatprep.subr.mxu0 0.0
        %777 = vmatpush1.msra.mxu0 0.0
        %778 = vmatprep.subr.mxu0 0.0
        %779 = vmatpush1.msra.mxu0 0.0
        %780 = vmatprep.subr.mxu0 0.0
        %781 = vmatpush1.msra.mxu0 0.0
        %782 = vmatprep.subr.mxu0 0.0
        %783 = vmatpush1.msra.mxu0 0.0
        %784 = vmatprep.subr.mxu0 0.0
        %785 = vmatpush1.msra.mxu0 0.0
        %786 = vmatprep.subr.mxu0 0.0
        %787 = vmatpush1.msra.mxu0 0.0
        %788 = vmatprep.subr.mxu0 0.0
        %789 = vmatpush1.msra.mxu0 0.0
        %790 = vmatprep.subr.mxu0 0.0
        %791 = vmatpush1.msra.mxu0 0.0
        %792 = vmatprep.mubr.f32.mxu0 0.0
        %793 = vmatmul.mubr.f32.gmra.mrb[0].mxu0 %v720
        %v794 = vpop.f32.mrb[0].mxu0
        %v795 = vadd.f32 0.0, %v794
        %v796 = vpop.f32.mrb[0].mxu0
        %v797 = vadd.f32 0.0, %v796
        %798 = vmatprep.mubr.f32.mxu0 0.0
        %799 = vmatmul.mubr.f32.gmra.mrb[0].mxu0 %v723
        %v800 = vpop.f32.mrb[0].mxu0
        %v801 = vadd.f32 0.0, %v800
        %v802 = vpop.f32.mrb[0].mxu0
        %v803 = vadd.f32 0.0, %v802
        %804 = vmatprep.mubr.f32.mxu0 0.0
        %805 = vmatmul.mubr.f32.gmra.mrb[0].mxu0 %v726
        %v806 = vpop.f32.mrb[0].mxu0
        %v807 = vadd.f32 0.0, %v806
        %v808 = vpop.f32.mrb[0].mxu0
        %v809 = vadd.f32 0.0, %v808
        %810 = vdwg.mxu0
        %811 = vmatprep.subr.mxu0 %v717
        %812 = vmatpush1.msra.mxu0 %v716
        %813 = vmatprep.subr.mxu0 0.0
        %814 = vmatpush1.msra.mxu0 0.0
        %815 = vmatprep.subr.mxu0 0.0
        %816 = vmatpush1.msra.mxu0 0.0
        %817 = vmatprep.subr.mxu0 0.0
        %818 = vmatpush1.msra.mxu0 0.0
        %819 = vmatprep.subr.mxu0 0.0
        %820 = vmatpush1.msra.mxu0 0.0
        %821 = vmatprep.subr.mxu0 0.0
        %822 = vmatpush1.msra.mxu0 0.0
        %823 = vmatprep.subr.mxu0 0.0
        %824 = vmatpush1.msra.mxu0 0.0
        %825 = vmatprep.subr.mxu0 0.0
        %826 = vmatpush1.msra.mxu0 0.0
        %827 = vmatprep.subr.mxu0 0.0
        %828 = vmatpush1.msra.mxu0 0.0
        %829 = vmatprep.subr.mxu0 0.0
        %830 = vmatpush1.msra.mxu0 0.0
        %831 = vmatprep.subr.mxu0 0.0
        %832 = vmatpush1.msra.mxu0 0.0
        %833 = vmatprep.subr.mxu0 0.0
        %834 = vmatpush1.msra.mxu0 0.0
        %835 = vmatprep.subr.mxu0 0.0
        %836 = vmatpush1.msra.mxu0 0.0
        %837 = vmatprep.subr.mxu0 0.0
        %838 = vmatpush1.msra.mxu0 0.0
        %839 = vmatprep.subr.mxu0 0.0
        %840 = vmatpush1.msra.mxu0 0.0
        %841 = vmatprep.subr.mxu0 0.0
        %842 = vmatpush1.msra.mxu0 0.0
        %843 = vmatprep.subr.mxu0 0.0
        %844 = vmatpush1.msra.mxu0 0.0
        %845 = vmatprep.subr.mxu0 0.0
        %846 = vmatpush1.msra.mxu0 0.0
        %847 = vmatprep.subr.mxu0 0.0
        %848 = vmatpush1.msra.mxu0 0.0
        %849 = vmatprep.subr.mxu0 0.0
        %850 = vmatpush1.msra.mxu0 0.0
        %851 = vmatprep.subr.mxu0 0.0
        %852 = vmatpush1.msra.mxu0 0.0
        %853 = vmatprep.subr.mxu0 0.0
        %854 = vmatpush1.msra.mxu0 0.0
        %855 = vmatprep.subr.mxu0 0.0
        %856 = vmatpush1.msra.mxu0 0.0
        %857 = vmatprep.subr.mxu0 0.0
        %858 = vmatpush1.msra.mxu0 0.0
        %859 = vmatprep.subr.mxu0 0.0
        %860 = vmatpush1.msra.mxu0 0.0
        %861 = vmatprep.subr.mxu0 0.0
        %862 = vmatpush1.msra.mxu0 0.0
        %863 = vmatprep.subr.mxu0 0.0
        %864 = vmatpush1.msra.mxu0 0.0
        %865 = vmatprep.subr.mxu0 0.0
        %866 = vmatpush1.msra.mxu0 0.0
        %867 = vmatprep.subr.mxu0 0.0
        %868 = vmatpush1.msra.mxu0 0.0
        %869 = vmatprep.subr.mxu0 0.0
        %870 = vmatpush1.msra.mxu0 0.0
        %871 = vmatprep.subr.mxu0 0.0
        %872 = vmatpush1.msra.mxu0 0.0
        %873 = vmatprep.subr.mxu0 0.0
        %874 = vmatpush1.msra.mxu0 0.0
        %875 = vmatprep.mubr.f32.mxu0 0.0
        %876 = vmatmul.mubr.f32.gmra.mrb[0].mxu0 %v720
        %v877 = vpop.f32.mrb[0].mxu0
        %v878 = vadd.f32 0.0, %v877
        %v879 = vpop.f32.mrb[0].mxu0
        %v880 = vadd.f32 0.0, %v879
        %881 = vmatprep.mubr.f32.mxu0 0.0
        %882 = vmatmul.mubr.f32.gmra.mrb[0].mxu0 %v723
        %v883 = vpop.f32.mrb[0].mxu0
        %v884 = vadd.f32 0.0, %v883
        %v885 = vpop.f32.mrb[0].mxu0
        %v886 = vadd.f32 0.0, %v885
        %887 = vmatprep.mubr.f32.mxu0 0.0
        %888 = vmatmul.mubr.f32.gmra.mrb[0].mxu0 %v726
        %v889 = vpop.f32.mrb[0].mxu0
        %v890 = vadd.f32 0.0, %v889
        %v891 = vpop.f32.mrb[0].mxu0
        %v892 = vadd.f32 0.0, %v891
        %893 = vdwg.mxu0
        %894 = vset.pattern.permute.xlu0 1
        %895 = vperm.xlu0 %894, %v414
        %v896 = vpop.permute.xlu0 %895
        %898 = vset.pattern.permute.xlu0 1
        %899 = vperm.xlu0 %898, %v415
        %v900 = vpop.permute.xlu0 %899
        %902 = vset.pattern.permute.xlu0 1
        %903 = vperm.xlu0 %902, %v416
        %v904 = vpop.permute.xlu0 %903
        %v906 = vmul.f32 %v688, %v896
        %v907 = vmul.f32 %v690, %v896
        %v908 = vmul.f32 %v692, %v896
        %v909 = vmul.f32 %v694, %v896
        %v910 = vmul.f32 %v696, %v900
        %v911 = vmul.f32 %v698, %v900
        %v912 = vmul.f32 %v700, %v900
        %v913 = vmul.f32 %v702, %v900
        %v914 = vmul.f32 %v704, %v904
        %v915 = vmul.f32 %v706, %v904
        %v916 = vmul.f32 %v708, %v904
        %v917 = vmul.f32 %v710, %v904
        %v918 = vmul.f32 %v688, %v688
        %v919 = vmul.f32 %v690, %v690
        %v920 = vmul.f32 %v692, %v692
        %v921 = vmul.f32 %v694, %v694
        %v922 = vmul.f32 %v696, %v696
        %v923 = vmul.f32 %v698, %v698
        %v924 = vmul.f32 %v700, %v700
        %v925 = vmul.f32 %v702, %v702
        %v926 = vmul.f32 %v704, %v704
        %v927 = vmul.f32 %v706, %v706
        %v928 = vmul.f32 %v708, %v708
        %v929 = vmul.f32 %v710, %v710
        %930 = vset.pattern.permute.xlu0 2
        %931 = vperm.xlu0 %930, %v414
        %v932 = vpop.permute.xlu0 %931
        %934 = vset.pattern.permute.xlu0 2
        %935 = vperm.xlu0 %934, %v415
        %v936 = vpop.permute.xlu0 %935
        %938 = vset.pattern.permute.xlu0 2
        %939 = vperm.xlu0 %938, %v416
        %v940 = vpop.permute.xlu0 %939
        %v942 = vmul.f32 %v918, %v932
        %v943 = vmul.f32 %v919, %v932
        %v944 = vmul.f32 %v920, %v932
        %v945 = vmul.f32 %v921, %v932
        %v946 = vmul.f32 %v922, %v936
        %v947 = vmul.f32 %v923, %v936
        %v948 = vmul.f32 %v924, %v936
        %v949 = vmul.f32 %v925, %v936
        %v950 = vmul.f32 %v926, %v940
        %v951 = vmul.f32 %v927, %v940
        %v952 = vmul.f32 %v928, %v940
        %v953 = vmul.f32 %v929, %v940
        %v954 = vadd.f32 %v906, %v942
        %v955 = vadd.f32 %v907, %v943
        %v956 = vadd.f32 %v908, %v944
        %v957 = vadd.f32 %v909, %v945
        %v958 = vadd.f32 %v910, %v946
        %v959 = vadd.f32 %v911, %v947
        %v960 = vadd.f32 %v912, %v948
        %v961 = vadd.f32 %v913, %v949
        %v962 = vadd.f32 %v914, %v950
        %v963 = vadd.f32 %v915, %v951
        %v964 = vadd.f32 %v916, %v952
        %v965 = vadd.f32 %v917, %v953
        %v966 = vadd.f32 %v954, %v795
        %v967 = vadd.f32 %v955, %v797
        %v968 = vadd.f32 %v956, %v878
        %v969 = vadd.f32 %v957, %v880
        %v970 = vadd.f32 %v958, %v801
        %v971 = vadd.f32 %v959, %v803
        %v972 = vadd.f32 %v960, %v884
        %v973 = vadd.f32 %v961, %v886
        %v974 = vadd.f32 %v962, %v807
        %v975 = vadd.f32 %v963, %v809
        %v976 = vadd.f32 %v964, %v890
        %v977 = vadd.f32 %v965, %v892
        %978 = vst [vmem:[%s383] sm:$0xff] %v966
        %979 = vst [vmem:[%s383 + $0x8] sm:$0xff] %v967
        %980 = vst [vmem:[%s383 + $0x10] sm:$0xff] %v968
        %981 = vst [vmem:[%s383 + $0x18] sm:$0xff] %v969
        %982 = vst [vmem:[%s383 + $0x20] sm:$0xff] %v970
        %983 = vst [vmem:[%s383 + $0x28] sm:$0xff] %v971
        %984 = vst [vmem:[%s383 + $0x30] sm:$0xff] %v972
        %985 = vst [vmem:[%s383 + $0x38] sm:$0xff] %v973
        %986 = vst [vmem:[%s383 + $0x40] sm:$0xff] %v974
        %987 = vst [vmem:[%s383 + $0x48] sm:$0xff] %v975
        %988 = vst [vmem:[%s383 + $0x50] sm:$0xff] %v976
        %989 = vst [vmem:[%s383 + $0x58] sm:$0xff] %v977
        %s990 = sand.u32 %s194, 1
        %s991 = scalar_lea.sflag [#allocation6], %s990
        %s992 = sand.u32 %s194, 1
        %s993 = smul.addr %s992, 96
        %s994 = scalar_lea.vmem [#allocation7], %s993
        %s995 = sand.u32 %s222, 1
        %s996 = scalar_lea.sflag [#allocation9], %s995
        %s997 = sand.u32 %s222, 1
        %s998 = smul.addr %s997, 96
        %s999 = scalar_lea.vmem [#allocation8], %s998
        // Predicated region
        $region45: #{tpu_custom_call.1} parent=39 // pred_check
          %p1000 = pneg %p204
        $region46: #{tpu_custom_call.1} parent=39 // pred_check_branch
          %1002 = sbr.rel (%p1000) target = $region48
        $region47: #{tpu_custom_call.1} parent=39 // pred_region
          %s1003 = smul.u32 4, %s38
          %s1005 = ssub.s32 1536, 1536
          %1006 = vsyncadd %s991, %s1005
          %s1007 = smul.addr %s39, 48
          %s1008 = sadd.s32 %s1003, %s1007
          %s1009 = smul.addr %s1008, 128
          %s1010 = scalar_lea.hbm %s6, %s1009
          %s1011 = sshll.u32 %s994, 4
          %s1012 = int_to_ptr.vmem [resolvable:$true] %s1011
          %1017 = dma.vmem_to_hbm [thread:$0]  %s1012, 1536, %s1010, %s991, 512, 2048, 32
        $region48: #{tpu_custom_call.1} parent=39 // pred_fallthru
          _
        // Predicated region
        $region49: #{tpu_custom_call.1} parent=39 // pred_check
          %p1018 = pneg %p232
        $region50: #{tpu_custom_call.1} parent=39 // pred_check_branch
          %1020 = sbr.rel (%p1018) target = $region52
        $region51: #{tpu_custom_call.1} parent=39 // pred_region
          %s1021 = smul.u32 4, %s38
          %s1023 = ssub.s32 1536, 1536
          %1024 = vsyncadd %s996, %s1023
          %s1025 = smul.addr %s39, 48
          %s1026 = sadd.s32 %s1021, %s1025
          %s1027 = smul.addr %s1026, 128
          %s1028 = scalar_lea.hbm %s7, %s1027
          %s1029 = sshll.u32 %s999, 4
          %s1030 = int_to_ptr.vmem [resolvable:$true] %s1029
          %1035 = dma.vmem_to_hbm [thread:$0]  %s1030, 1536, %s1028, %s996, 512, 2048, 32
        $region52: #{tpu_custom_call.1} parent=39 // pred_fallthru
          _
      $region40: #{tpu_custom_call.1} parent=5 // pred_fallthru
        _
      %p1036 = scmp.le.s32.totalorder 2, %s29
      // Predicated region
      $region53: #{tpu_custom_call.1} parent=5 // pred_check
        %p1037 = pneg %p1036
      $region54: #{tpu_custom_call.1} parent=5 // pred_check_branch
        %1039 = sbr.rel (%p1037) target = $region56
      $region55: #{tpu_custom_call.1} parent=5 // pred_region
        %s1040 = ssub.s32 %s29, 2
        // Predicated region
        $region57: #{tpu_custom_call.1} parent=55 // pred_check
          %p1041 = pneg %p210
        $region58: #{tpu_custom_call.1} parent=55 // pred_check_branch
          %1043 = sbr.rel (%p1041) target = $region60
        $region59: #{tpu_custom_call.1} parent=55 // pred_region
          %s1044 = sand.u32 %s195, 1
          %s1045 = scalar_lea.sflag [#allocation6], %s1044
          %s1046 = sand.u32 %s195, 1
          %s1047 = smul.addr %s1046, 96
          %s1048 = scalar_lea.vmem [#allocation7], %s1047
          %1049 = dma.done %s1045, 1536
        $region60: #{tpu_custom_call.1} parent=55 // pred_fallthru
          _
        // Predicated region
        $region61: #{tpu_custom_call.1} parent=55 // pred_check
          %p1050 = pneg %p238
        $region62: #{tpu_custom_call.1} parent=55 // pred_check_branch
          %1052 = sbr.rel (%p1050) target = $region64
        $region63: #{tpu_custom_call.1} parent=55 // pred_region
          %s1053 = sand.u32 %s223, 1
          %s1054 = scalar_lea.sflag [#allocation9], %s1053
          %s1055 = sand.u32 %s223, 1
          %s1056 = smul.addr %s1055, 96
          %s1057 = scalar_lea.vmem [#allocation8], %s1056
          %1058 = dma.done %s1054, 1536
        $region64: #{tpu_custom_call.1} parent=55 // pred_fallthru
          _
      $region56: #{tpu_custom_call.1} parent=5 // pred_fallthru
        _
    $region6: #{tpu_custom_call.1} parent=1 // loop_footer
      %s33 = sadd.s32 1, %s29
    $region7: #{tpu_custom_call.1} parent=1 // loop_footer_branch
      %28 = sbr.rel target = $region3
    $region8: #{tpu_custom_call.1} parent=1 // loop_exit
      _
    %1059 = vsyncpa [#allocation5], 1
    %s1060 = scalar_lea.sflag [#allocation5], 1
    %1061 = vsyncpa %s1060, 1
    %1062 = vsyncpa [#allocation6], 1
    %s1063 = scalar_lea.sflag [#allocation6], 1
    %1064 = vsyncpa %s1063, 1
    %1065 = vsyncpa [#allocation9], 1
    %s1066 = scalar_lea.sflag [#allocation9], 1
    %1067 = vsyncpa %s1066, 1

</llo_original>
